<compile_context>
chip_gen: v5e
topology: v5e:2x2
jax: 0.10.0
libtpu: 0.0.40
codegen_flags: <defaults>
</compile_context>

<pallas_src>
import functools

import jax
import jax.numpy as jnp
import numpy as np
from jax.experimental import pallas as pl
from jax.experimental.pallas import tpu as pltpu


def _round_up(x, m):
    return (x + m - 1) // m * m


def _dml_kernel(split_ref, logits_ref, targets_ref, out_ref,
                *, gamma1, gamma2, ignore_index, hw, plain):
    logits = logits_ref[...].astype(jnp.float32)            # (C, T)
    tgt = targets_ref[...]                                   # (2, T)
    labels = tgt[0:1, :].astype(jnp.int32)                   # (1, T) pseudo labels

    num_classes = logits.shape[0]
    tile = logits.shape[1]

    valid = labels != ignore_index                            # (1, T)
    if hw % tile != 0:
        # Ragged tail: mask lanes past the true image size (no wrapper pad copy).
        lane = jax.lax.broadcasted_iota(jnp.int32, (1, tile), 1)
        valid = valid & ((pl.program_id(1) * tile + lane) < hw)
    safe_lab = jnp.where(valid, labels, 0)                    # temp[temp == ignore] = 0

    # log-softmax pieces (all reductions are per-lane over the channel axis).
    m = jnp.max(logits, axis=0, keepdims=True)                                  # (1, T)
    lse = m + jnp.log(jnp.sum(jnp.exp(logits - m), axis=0, keepdims=True))      # (1, T)

    cidx = jax.lax.broadcasted_iota(jnp.int32, logits.shape, 0)                 # (C, T)
    onehot = (cidx == safe_lab).astype(jnp.float32)
    logit_at = jnp.sum(onehot * logits, axis=0, keepdims=True)                  # (1, T)

    # CrossEntropyLoss(reduction='none', ignore_index=...)
    ce = jnp.where(valid, lse - logit_at, jnp.float32(0.0))
    validf = valid.astype(jnp.float32)

    rows = [(0, jnp.sum(ce, axis=1, keepdims=True)),
            (2, jnp.sum(validf, axis=1, keepdims=True))]

    if not plain:
        conf_ps = tgt[1:2, :].astype(jnp.float32)             # pseudo-label confidence

        # argmax over channels, first maximal index (torch.argmax tie-breaking)
        is_max = logits == m
        decision = jnp.min(jnp.where(is_max, cidx, num_classes), axis=0, keepdims=True)

        conf_cur = jnp.exp(m - lse)        # max softmax probability
        logp = logit_at - lse              # log prob at (clamped) pseudo label

        disagree = decision != labels
        win = conf_cur > conf_ps

        # prob ** gamma == exp(gamma * logp); one EUP exp for both branches.
        g = jnp.where(disagree, jnp.float32(gamma2), jnp.float32(gamma1))
        dyn = jnp.where(disagree & win, jnp.float32(0.0), jnp.exp(g * logp))

        # batch rows >= split_index get weight 1.0 (dynamic_weights[split_index:] = 1)
        lab_f = (pl.program_id(0) < split_ref[0]).astype(jnp.float32)
        dyn = dyn * lab_f + (jnp.float32(1.0) - lab_f)
        # zero at invalid/OOB lanes (also kills any NaN from garbage tail data)
        dyn = jnp.where(valid, dyn, jnp.float32(0.0))

        dis_stat = (disagree & valid).astype(jnp.float32) * lab_f
        win_stat = (disagree & win & valid).astype(jnp.float32) * lab_f

        rows += [(1, jnp.sum(ce * dyn, axis=1, keepdims=True)),
                 (3, jnp.sum(dis_stat, axis=1, keepdims=True)),
                 (4, jnp.sum(win_stat, axis=1, keepdims=True)),
                 (5, jnp.sum(dyn, axis=1, keepdims=True))]      # dyn already 0 where invalid

    # Fused epilogue: assemble all partial sums into one (8, 128) block, one store.
    ridx = jax.lax.broadcasted_iota(jnp.int32, (8, 128), 0)
    acc = jnp.zeros((8, 128), jnp.float32)
    for r, v in rows:
        acc = jnp.where(ridx == r, v, acc)
    out_ref[...] = acc


def _pick_tile(HW, C, in_bytes, tgt_bytes, tile_hw, N):
    """Lane-tile sizing: multiple of 128 (or the full pixel axis), VMEM-honest cap."""
    budget = 28 << 20   # conservative: must fit v7x's smaller VMEM with headroom
    bytes_per_lane = (2 * 2 * (C * in_bytes + 2 * tgt_bytes)   # double-buffered input blocks
                      + 8 * C * 4                              # live (C, tile) f32 temporaries
                      + 64 * 4)                                # (1, tile) f32 temporaries
    tile_cap = max(128, (budget // bytes_per_lane) // 128 * 128)
    if tile_hw is None:
        # target >= ~1 MiB HBM moved per grid step to amortize per-step overhead
        per_lane_hbm = max(1, C * in_bytes + 2 * tgt_bytes)
        tile_req = max(16384, _round_up((1 << 20) // per_lane_hbm, 128))
    else:
        tile_req = max(128, (int(tile_hw) // 128) * 128)
    tile = min(tile_req, tile_cap)
    if N == 1 and HW > 256:
        # keep >= 2 grid steps so both v7x TensorCores get work
        tile = min(tile, max(128, _round_up((HW + 1) // 2, 128)))
    if tile >= HW:
        return HW, 1            # one full-width block (any HW; no tail mask needed)
    return tile, pl.cdiv(HW, tile)


@functools.partial(jax.jit, static_argnums=(3, 4, 5, 6, 7))
def _dml_partials(inputs, targets, split_arr, gamma1, gamma2, ignore_index,
                  tile_hw, plain):
    N, C, H, W = inputs.shape
    HW = H * W
    in_bytes = inputs.dtype.itemsize
    tgt_bytes = targets.dtype.itemsize

    tile, ti = _pick_tile(HW, C, in_bytes, tgt_bytes, tile_hw, N)
    total_tiles = N * ti

    # No dtype upcast, no padding copy: stream logits/targets as-is.
    logits3 = inputs.reshape(N, C, HW)
    targets3 = targets.reshape(N, 2, HW)

    kernel = functools.partial(
        _dml_kernel, gamma1=float(gamma1), gamma2=float(gamma2),
        ignore_index=int(ignore_index), hw=HW, plain=bool(plain))

    out = pl.pallas_call(
        kernel,
        out_shape=jax.ShapeDtypeStruct((8, total_tiles * 128), jnp.float32),
        grid_spec=pltpu.PrefetchScalarGridSpec(
            num_scalar_prefetch=1,
            grid=(N, ti),
            in_specs=[
                pl.BlockSpec((pl.Squeezed(), C, tile),
                             lambda n, i, split: (n, 0, i)),
                pl.BlockSpec((pl.Squeezed(), 2, tile),
                             lambda n, i, split: (n, 0, i)),
            ],
            out_specs=pl.BlockSpec((8, 128),
                                   lambda n, i, split: (0, n * ti + i)),
        ),
        compiler_params=pltpu.CompilerParams(
            dimension_semantics=("parallel", "parallel"),
            vmem_limit_bytes=40 << 20),
    )(split_arr, logits3, targets3)

    per_tile = out.reshape(8, total_tiles, 128)[:, :, 0]     # (8, total_tiles)
    return per_tile, per_tile.sum(axis=1)


def dynamic_mutual_loss(inputs, targets, split_index=None,
                        gamma1=0.0, gamma2=0.0, ignore_index=-100, tile_hw=None):
    """inputs: (N, C, H, W) logits (f32 or bf16, NCHW like PyTorch).
       targets: (N, 2, H, W); channel 0 = pseudo labels, channel 1 = confidence."""
    N = inputs.shape[0]
    plain = split_index is None or (gamma1 == 0 and gamma2 == 0)
    si = N if split_index is None else int(split_index)
    split_arr = jnp.array([si], dtype=jnp.int32)

    per_tile, sums = _dml_partials(inputs, targets, split_arr,
                                   float(gamma1), float(gamma2),
                                   int(ignore_index), tile_hw, bool(plain))

    denom = jnp.maximum(sums[2], jnp.float32(1.0))        # guard all-ignored case
    total_loss = (sums[0] if plain else sums[1]) / denom

    # single device->host transfer; exact counts via float64 cross-tile reduce
    host = np.asarray(jax.device_get(per_tile), dtype=np.float64).sum(axis=1)
    h_valid = max(float(host[2]), 1.0)
    stats = {'disagree': -1, 'current_win': -1, 'avg_weights': 1.0,
             'loss': float(host[0]) / h_valid}     # unweighted CE mean (matches PyTorch)
    if not plain:
        stats['disagree'] = int(round(float(host[3])))
        stats['current_win'] = int(round(float(host[4])))
        stats['avg_weights'] = float(host[5]) / h_valid
    return total_loss, stats


def _reference_jax(inputs, targets, split_index, gamma1, gamma2, ignore_index):
    """Pure-JAX mirror of the PyTorch module, for sanity checking."""
    labels = targets[:, 0].astype(jnp.int32)
    conf_ps = targets[:, 1]
    valid = labels != ignore_index
    safe = jnp.where(valid, labels, 0)
    logp = jax.nn.log_softmax(inputs, axis=1)
    lp_at = jnp.take_along_axis(logp, safe[:, None], axis=1)[:, 0]
    ce = jnp.where(valid, -lp_at, 0.0)
    probs = jnp.exp(logp)
    decision = jnp.argmax(inputs, axis=1)
    conf_cur = jnp.max(probs, axis=1)
    prob_at = jnp.exp(lp_at)
    disagree = decision != labels
    win = conf_cur > conf_ps
    dyn = jnp.where(disagree,
                    jnp.where(win, 0.0, prob_at ** gamma2),
                    prob_at ** gamma1)
    N = inputs.shape[0]
    in_lab = jnp.arange(N)[:, None, None] < split_index
    dyn = jnp.where(in_lab, dyn, 1.0)
    n_valid = jnp.maximum(valid.sum(), 1)
    loss_plain = ce.sum() / n_valid
    loss_dyn = (ce * dyn).sum() / n_valid
    dis = (disagree & valid & in_lab).sum()
    winc = (disagree & win & valid & in_lab).sum()
    avgw = (dyn * valid).sum() / n_valid
    return loss_plain, loss_dyn, dis, winc, avgw


if __name__ == "__main__":
    # Case 1 & 2: f32 logits, dynamic-weight branch + plain-CE branch.
    key = jax.random.PRNGKey(0)
    N, C, H, W = 2, 4, 16, 16
    k1, k2, k3, k4 = jax.random.split(key, 4)
    inputs = jax.random.normal(k1, (N, C, H, W), dtype=jnp.float32)
    labels = jax.random.randint(k2, (N, H, W), 0, C)
    labels = jnp.where(jax.random.uniform(k3, (N, H, W)) < 0.1, -100, labels)
    conf_pseudo = jax.random.uniform(k4, (N, H, W), dtype=jnp.float32)
    targets = jnp.stack([labels.astype(jnp.float32), conf_pseudo], axis=1)

    loss, stats = dynamic_mutual_loss(inputs, targets, split_index=1,
                                      gamma1=2.0, gamma2=4.0)
    jax.block_until_ready(loss)
    loss_plain, stats_plain = dynamic_mutual_loss(inputs, targets, split_index=None)
    jax.block_until_ready(loss_plain)

    ref_plain, ref_dyn, ref_dis, ref_win, ref_avgw = _reference_jax(
        inputs, targets, 1, 2.0, 4.0, -100)
    np.testing.assert_allclose(float(loss), float(ref_dyn), rtol=1e-3, atol=1e-4)
    np.testing.assert_allclose(float(loss_plain), float(ref_plain), rtol=1e-3, atol=1e-4)
    np.testing.assert_allclose(stats['avg_weights'], float(ref_avgw), rtol=1e-3, atol=1e-4)
    assert stats['disagree'] == int(ref_dis)
    assert stats['current_win'] == int(ref_win)
    assert stats_plain['disagree'] == -1 and stats_plain['current_win'] == -1

    # Case 3: bf16 logits + ragged HW (15*15 = 225 with 128-lane tiles -> masked tail).
    N2, C2, H2, W2 = 2, 5, 15, 15
    k5, k6, k7, k8 = jax.random.split(jax.random.PRNGKey(1), 4)
    inputs2 = jax.random.normal(k5, (N2, C2, H2, W2), dtype=jnp.float32).astype(jnp.bfloat16)
    labels2 = jax.random.randint(k6, (N2, H2, W2), 0, C2)
    labels2 = jnp.where(jax.random.uniform(k7, (N2, H2, W2)) < 0.15, -100, labels2)
    conf2 = jax.random.uniform(k8, (N2, H2, W2), dtype=jnp.float32)
    targets2 = jnp.stack([labels2.astype(jnp.float32), conf2], axis=1)

    loss2, stats2 = dynamic_mutual_loss(inputs2, targets2, split_index=1,
                                        gamma1=0.5, gamma2=2.0, tile_hw=128)
    jax.block_until_ready(loss2)
    r2_plain, r2_dyn, r2_dis, r2_win, r2_avgw = _reference_jax(
        inputs2.astype(jnp.float32), targets2, 1, 0.5, 2.0, -100)
    np.testing.assert_allclose(float(loss2), float(r2_dyn), rtol=2e-3, atol=1e-4)
    np.testing.assert_allclose(stats2['avg_weights'], float(r2_avgw), rtol=2e-3, atol=1e-4)
    assert stats2['disagree'] == int(r2_dis)
    assert stats2['current_win'] == int(r2_win)

    print("KERNEL_OK")
</pallas_src>

<mosaic_0001>
module attributes {stable_mosaic.version = 11 : i64} {
  func.func @_dml_kernel(%arg0: i32, %arg1: i32, %arg2: memref<1xi32, #tpu.memory_space<smem>>, %arg3: memref<1x4x256xf32, #tpu.memory_space<vmem>>, %arg4: memref<1x2x256xf32, #tpu.memory_space<vmem>>, %arg5: memref<8x128xf32, #tpu.memory_space<vmem>>) attributes {dimension_semantics = [#tpu.dimension_semantics<parallel>, #tpu.dimension_semantics<parallel>], iteration_bounds = array<i64: 2, 1>, scalar_prefetch = 1 : i64, scratch_operands = 0 : i64, tpu.core_type = #tpu.core_type<tc>, window_params = [{transform_indices = @transform_0, window_bounds = array<i64: 1, 4, 256>}, {transform_indices = @transform_1, window_bounds = array<i64: 1, 2, 256>}, {transform_indices = @transform_2, window_bounds = array<i64: 8, 128>}]} {
    %c0 = arith.constant 0 : index
    %c0_0 = arith.constant 0 : index
    %c0_1 = arith.constant 0 : index
    %0 = vector.load %arg3[%c0, %c0_0, %c0_1] : memref<1x4x256xf32, #tpu.memory_space<vmem>>, vector<1x4x256xf32>
    %1 = vector.shape_cast %0 : vector<1x4x256xf32> to vector<4x256xf32>
    %c0_2 = arith.constant 0 : index
    %c0_3 = arith.constant 0 : index
    %c0_4 = arith.constant 0 : index
    %2 = vector.load %arg4[%c0_2, %c0_3, %c0_4] : memref<1x2x256xf32, #tpu.memory_space<vmem>>, vector<1x2x256xf32>
    %3 = vector.shape_cast %2 : vector<1x2x256xf32> to vector<2x256xf32>
    %4 = vector.extract_strided_slice %3 {offsets = [0, 0], sizes = [1, 256], strides = [1, 1]} : vector<2x256xf32> to vector<1x256xf32>
    %5 = arith.fptosi %4 : vector<1x256xf32> to vector<1x256xi32>
    %c-100_i32 = arith.constant -100 : i32
    %6 = vector.broadcast %c-100_i32 : i32 to vector<1x256xi32>
    %7 = arith.cmpi ne, %5, %6 : vector<1x256xi32>
    %c0_i32 = arith.constant 0 : i32
    %8 = vector.broadcast %c0_i32 : i32 to vector<1x256xi32>
    %9 = arith.select %7, %5, %8 : vector<1x256xi1>, vector<1x256xi32>
    %cst = arith.constant dense<0xFF800000> : vector<256xf32>
    %10 = vector.multi_reduction <maximumf>, %1, %cst [0] : vector<4x256xf32> to vector<256xf32>
    %11 = vector.shape_cast %10 : vector<256xf32> to vector<1x256xf32>
    %12 = vector.broadcast %11 : vector<1x256xf32> to vector<4x256xf32>
    %13 = arith.subf %1, %12 : vector<4x256xf32>
    %14 = math.exp %13 : vector<4x256xf32>
    %cst_5 = arith.constant dense<0.000000e+00> : vector<256xf32>
    %15 = vector.multi_reduction <add>, %14, %cst_5 [0] : vector<4x256xf32> to vector<256xf32>
    %16 = vector.shape_cast %15 : vector<256xf32> to vector<1x256xf32>
    %17 = math.log %16 : vector<1x256xf32>
    %18 = arith.addf %11, %17 : vector<1x256xf32>
    %19 = tpu.iota {dimensions = array<i32: 0>} : vector<4x256xi32>
    %20 = vector.broadcast %9 : vector<1x256xi32> to vector<4x256xi32>
    %21 = arith.cmpi eq, %19, %20 : vector<4x256xi32>
    %22 = arith.extui %21 : vector<4x256xi1> to vector<4x256xi32>
    %23 = arith.sitofp %22 : vector<4x256xi32> to vector<4x256xf32>
    %24 = arith.mulf %23, %1 : vector<4x256xf32>
    %cst_6 = arith.constant dense<0.000000e+00> : vector<256xf32>
    %25 = vector.multi_reduction <add>, %24, %cst_6 [0] : vector<4x256xf32> to vector<256xf32>
    %26 = vector.shape_cast %25 : vector<256xf32> to vector<1x256xf32>
    %27 = arith.subf %18, %26 : vector<1x256xf32>
    %cst_7 = arith.constant 0.000000e+00 : f32
    %28 = vector.broadcast %cst_7 : f32 to vector<1x256xf32>
    %29 = arith.select %7, %27, %28 : vector<1x256xi1>, vector<1x256xf32>
    %30 = arith.extui %7 : vector<1x256xi1> to vector<1x256xi32>
    %31 = arith.sitofp %30 : vector<1x256xi32> to vector<1x256xf32>
    %cst_8 = arith.constant dense<0.000000e+00> : vector<1xf32>
    %32 = vector.multi_reduction <add>, %29, %cst_8 [1] : vector<1x256xf32> to vector<1xf32>
    %33 = vector.shape_cast %32 : vector<1xf32> to vector<1x1xf32>
    %cst_9 = arith.constant dense<0.000000e+00> : vector<1xf32>
    %34 = vector.multi_reduction <add>, %31, %cst_9 [1] : vector<1x256xf32> to vector<1xf32>
    %35 = vector.shape_cast %34 : vector<1xf32> to vector<1x1xf32>
    %36 = vector.extract_strided_slice %3 {offsets = [1, 0], sizes = [1, 256], strides = [1, 1]} : vector<2x256xf32> to vector<1x256xf32>
    %37 = vector.broadcast %11 : vector<1x256xf32> to vector<4x256xf32>
    %38 = arith.cmpf oeq, %1, %37 : vector<4x256xf32>
    %c4_i32 = arith.constant 4 : i32
    %39 = vector.broadcast %c4_i32 : i32 to vector<4x256xi32>
    %40 = arith.select %38, %19, %39 : vector<4x256xi1>, vector<4x256xi32>
    %cst_10 = arith.constant dense<2147483647> : vector<256xi32>
    %41 = vector.multi_reduction <minsi>, %40, %cst_10 [0] : vector<4x256xi32> to vector<256xi32>
    %42 = vector.shape_cast %41 : vector<256xi32> to vector<1x256xi32>
    %43 = arith.subf %11, %18 : vector<1x256xf32>
    %44 = math.exp %43 : vector<1x256xf32>
    %45 = arith.subf %26, %18 : vector<1x256xf32>
    %46 = arith.cmpi ne, %42, %5 : vector<1x256xi32>
    %47 = arith.cmpf ogt, %44, %36 : vector<1x256xf32>
    %cst_11 = arith.constant 4.000000e+00 : f32
    %cst_12 = arith.constant 2.000000e+00 : f32
    %48 = vector.broadcast %cst_11 : f32 to vector<1x256xf32>
    %49 = vector.broadcast %cst_12 : f32 to vector<1x256xf32>
    %50 = arith.select %46, %48, %49 : vector<1x256xi1>, vector<1x256xf32>
    %51 = arith.andi %46, %47 : vector<1x256xi1>
    %52 = arith.mulf %50, %45 : vector<1x256xf32>
    %53 = math.exp %52 : vector<1x256xf32>
    %cst_13 = arith.constant 0.000000e+00 : f32
    %54 = vector.broadcast %cst_13 : f32 to vector<1x256xf32>
    %55 = arith.select %51, %54, %53 : vector<1x256xi1>, vector<1x256xf32>
    %c0_14 = arith.constant 0 : index
    %56 = memref.load %arg2[%c0_14] : memref<1xi32, #tpu.memory_space<smem>>
    %57 = arith.cmpi slt, %arg0, %56 : i32
    %58 = arith.extui %57 : i1 to i32
    %59 = arith.sitofp %58 : i32 to f32
    %60 = vector.broadcast %59 : f32 to vector<1x256xf32>
    %61 = arith.mulf %55, %60 : vector<1x256xf32>
    %cst_15 = arith.constant 1.000000e+00 : f32
    %62 = arith.subf %cst_15, %59 : f32
    %63 = vector.broadcast %62 : f32 to vector<1x256xf32>
    %64 = arith.addf %61, %63 : vector<1x256xf32>
    %cst_16 = arith.constant 0.000000e+00 : f32
    %65 = vector.broadcast %cst_16 : f32 to vector<1x256xf32>
    %66 = arith.select %7, %64, %65 : vector<1x256xi1>, vector<1x256xf32>
    %67 = arith.andi %46, %7 : vector<1x256xi1>
    %68 = arith.extui %67 : vector<1x256xi1> to vector<1x256xi32>
    %69 = arith.sitofp %68 : vector<1x256xi32> to vector<1x256xf32>
    %70 = vector.broadcast %59 : f32 to vector<1x256xf32>
    %71 = arith.mulf %69, %70 : vector<1x256xf32>
    %72 = arith.andi %46, %47 : vector<1x256xi1>
    %73 = arith.andi %72, %7 : vector<1x256xi1>
    %74 = arith.extui %73 : vector<1x256xi1> to vector<1x256xi32>
    %75 = arith.sitofp %74 : vector<1x256xi32> to vector<1x256xf32>
    %76 = vector.broadcast %59 : f32 to vector<1x256xf32>
    %77 = arith.mulf %75, %76 : vector<1x256xf32>
    %78 = arith.mulf %29, %66 : vector<1x256xf32>
    %cst_17 = arith.constant dense<0.000000e+00> : vector<1xf32>
    %79 = vector.multi_reduction <add>, %78, %cst_17 [1] : vector<1x256xf32> to vector<1xf32>
    %80 = vector.shape_cast %79 : vector<1xf32> to vector<1x1xf32>
    %cst_18 = arith.constant dense<0.000000e+00> : vector<1xf32>
    %81 = vector.multi_reduction <add>, %71, %cst_18 [1] : vector<1x256xf32> to vector<1xf32>
    %82 = vector.shape_cast %81 : vector<1xf32> to vector<1x1xf32>
    %cst_19 = arith.constant dense<0.000000e+00> : vector<1xf32>
    %83 = vector.multi_reduction <add>, %77, %cst_19 [1] : vector<1x256xf32> to vector<1xf32>
    %84 = vector.shape_cast %83 : vector<1xf32> to vector<1x1xf32>
    %cst_20 = arith.constant dense<0.000000e+00> : vector<1xf32>
    %85 = vector.multi_reduction <add>, %66, %cst_20 [1] : vector<1x256xf32> to vector<1xf32>
    %86 = vector.shape_cast %85 : vector<1xf32> to vector<1x1xf32>
    %87 = tpu.iota {dimensions = array<i32: 0>} : vector<8x128xi32>
    %cst_21 = arith.constant 0.000000e+00 : f32
    %88 = vector.broadcast %cst_21 : f32 to vector<8x128xf32>
    %c0_i32_22 = arith.constant 0 : i32
    %89 = vector.broadcast %c0_i32_22 : i32 to vector<8x128xi32>
    %90 = arith.cmpi eq, %87, %89 : vector<8x128xi32>
    %91 = vector.shape_cast %33 : vector<1x1xf32> to vector<1x1xf32>
    %92 = vector.broadcast %91 : vector<1x1xf32> to vector<8x128xf32>
    %93 = arith.select %90, %92, %88 : vector<8x128xi1>, vector<8x128xf32>
    %c2_i32 = arith.constant 2 : i32
    %94 = vector.broadcast %c2_i32 : i32 to vector<8x128xi32>
    %95 = arith.cmpi eq, %87, %94 : vector<8x128xi32>
    %96 = vector.shape_cast %35 : vector<1x1xf32> to vector<1x1xf32>
    %97 = vector.broadcast %96 : vector<1x1xf32> to vector<8x128xf32>
    %98 = arith.select %95, %97, %93 : vector<8x128xi1>, vector<8x128xf32>
    %c1_i32 = arith.constant 1 : i32
    %99 = vector.broadcast %c1_i32 : i32 to vector<8x128xi32>
    %100 = arith.cmpi eq, %87, %99 : vector<8x128xi32>
    %101 = vector.shape_cast %80 : vector<1x1xf32> to vector<1x1xf32>
    %102 = vector.broadcast %101 : vector<1x1xf32> to vector<8x128xf32>
    %103 = arith.select %100, %102, %98 : vector<8x128xi1>, vector<8x128xf32>
    %c3_i32 = arith.constant 3 : i32
    %104 = vector.broadcast %c3_i32 : i32 to vector<8x128xi32>
    %105 = arith.cmpi eq, %87, %104 : vector<8x128xi32>
    %106 = vector.shape_cast %82 : vector<1x1xf32> to vector<1x1xf32>
    %107 = vector.broadcast %106 : vector<1x1xf32> to vector<8x128xf32>
    %108 = arith.select %105, %107, %103 : vector<8x128xi1>, vector<8x128xf32>
    %c4_i32_23 = arith.constant 4 : i32
    %109 = vector.broadcast %c4_i32_23 : i32 to vector<8x128xi32>
    %110 = arith.cmpi eq, %87, %109 : vector<8x128xi32>
    %111 = vector.shape_cast %84 : vector<1x1xf32> to vector<1x1xf32>
    %112 = vector.broadcast %111 : vector<1x1xf32> to vector<8x128xf32>
    %113 = arith.select %110, %112, %108 : vector<8x128xi1>, vector<8x128xf32>
    %c5_i32 = arith.constant 5 : i32
    %114 = vector.broadcast %c5_i32 : i32 to vector<8x128xi32>
    %115 = arith.cmpi eq, %87, %114 : vector<8x128xi32>
    %116 = vector.shape_cast %86 : vector<1x1xf32> to vector<1x1xf32>
    %117 = vector.broadcast %116 : vector<1x1xf32> to vector<8x128xf32>
    %118 = arith.select %115, %117, %113 : vector<8x128xi1>, vector<8x128xf32>
    %c0_24 = arith.constant 0 : index
    %c0_25 = arith.constant 0 : index
    %119 = vector.load %arg5[%c0_24, %c0_25] : memref<8x128xf32, #tpu.memory_space<vmem>>, vector<8x128xf32>
    tpu.vector_store %arg5[%c0_24, %c0_25], %118 {strides = array<i32>} : memref<8x128xf32, #tpu.memory_space<vmem>>, vector<8x128xf32>,
    return
  }
  func.func @transform_0(%arg0: i32, %arg1: i32, %arg2: memref<1xi32, #tpu.memory_space<smem>>) -> (i32, i32, i32) {
    %c0_i32 = arith.constant 0 : i32
    %c0_i32_0 = arith.constant 0 : i32
    return %arg0, %c0_i32, %arg1 : i32, i32, i32
  }
  func.func @transform_1(%arg0: i32, %arg1: i32, %arg2: memref<1xi32, #tpu.memory_space<smem>>) -> (i32, i32, i32) {
    %c0_i32 = arith.constant 0 : i32
    %c0_i32_0 = arith.constant 0 : i32
    return %arg0, %c0_i32, %arg1 : i32, i32, i32
  }
  func.func @transform_2(%arg0: i32, %arg1: i32, %arg2: memref<1xi32, #tpu.memory_space<smem>>) -> (i32, i32) {
    %c1_i32 = arith.constant 1 : i32
    %0 = arith.muli %arg0, %c1_i32 : i32
    %1 = arith.addi %0, %arg1 : i32
    %c0_i32 = arith.constant 0 : i32
    %c0_i32_0 = arith.constant 0 : i32
    return %c0_i32, %1 : i32, i32
  }
}

</mosaic_0001>

<llo_original>
// kernel: _dml_partials.1
$region0: #{_dml_partials.1}
  #allocation0 [shape = 'u32[]', space=smem, size = 0x4, offset = 0x4, fixed_abs, tag = 'smem constant byte address 0x4 - core index']
  #allocation1 [shape = 'u32[72,128]{1,0:T(1,128)}', space=vmem, size = 0x9000, scoped, tag = 'internal scratch']
  #allocation2 [shape = 's32[1]{0}', space=sflag, size = 0x4, scoped, tag = 'scoped memory for _dml_partials.1']
  #allocation3 [shape = 's32[1]{0:T(128)S(6)}', space=smem, size = 0x200, scoped, tag = 'prefetched SMEM operand 0']
  %s0 = inlined_call_operand.<no memory space> [shape: s32[1], index: 0, kind: input, shape index: {}]
  %s1 = inlined_call_operand.vmem [shape: f32[2,4,256], index: 1, kind: input, shape index: {}]
  %s2 = inlined_call_operand.vmem [shape: f32[2,2,256], index: 2, kind: input, shape index: {}]
  %s3 = inlined_call_operand.vmem [shape: f32[8,256], index: 3, kind: output, shape index: {}]
  %s4 = sld [smem:[#allocation0]]
  $region41: #{_dml_partials.1} parent=0
    _
  %s6 = ssub.s32 1, %s4
  %s7 = scalar_select 0, %s6, %s4
  %8 = sst [smem:[#allocation3]] %s0
  loop: start=0, step=1, limit=4
  $region2: #{_dml_partials.1} parent=0 // loop_pre_header
    _
  $region3: #{_dml_partials.1} parent=0 // loop_header
    %s10 = sphi 0, %s14
    %p11 = scmp.ge.s32.totalorder %s10, 4
    %s17 = sphi 0, %s29
    %s18 = sphi 0, %s25
    %s19 = sphi 0, %s17
    %s20 = sphi 0, %s18
    %s21 = sphi 0, %s19
    %s22 = sphi 0, %s20
    %s34 = sphi 0, %s36
    %s37 = sphi 0, %s34
    %s38 = sphi 0, %s37
    %s54 = sphi 0, %s38
    %s62 = sphi 0, %s64
    %s65 = sphi 0, %s62
    %s66 = sphi 0, %s65
    %s82 = sphi 0, %s66
    %s90 = sphi 0, %s92
    %s93 = sphi 0, %s90
    %s94 = sphi 0, %s93
    %s110 = sphi 0, %s94
  $region4: #{_dml_partials.1} parent=0 // loop_header_branch
    %13 = sbr.rel (%p11) target = $region8
  $region5: #{_dml_partials.1} parent=0 // loop_body
    %s15 = ssub.s32 %s10, 1
    %s16 = ssub.s32 %s10, 2
    %s23 = sadd.s32 1, %s18
    %p24 = scmp.ge.s32.totalorder %s23, 1
    %s25 = scalar_select %p24, 0, %s23
    %s26 = sadd.s32 1, %s17
    %s27 = scalar_select %p24, %s26, %s17
    %p28 = scmp.ge.s32.totalorder %s27, 2
    %s29 = scalar_select %p28, 0, %s27
    %s30 = ssub.s32 %s17, %s29
    %s31 = ssub.s32 %s18, %s25
    %s32 = sor.u32 %s30, %s31
    %p33 = scmp.eq.s32.totalorder %s32, 0
    %s35 = sadd.s32 %s34, 1
    %s36 = scalar_select %p33, %s34, %s35
    %p39 = pneg %p33
    %p40 = scmp.eq.s32.totalorder %s10, 1
    %p41 = por %p39, %p40
    %p42 = scmp.ne.s32.totalorder %s34, %s37
    %p43 = scmp.eq.s32.totalorder %s10, 0
    %p44 = por %p42, %p43
    %p45 = scmp.ne.s32.totalorder %s34, %s37
    %p46 = scmp.eq.s32.totalorder %s15, 1
    %p47 = por %p45, %p46
    %p48 = scmp.ne.s32.totalorder %s37, %s38
    %p49 = scmp.eq.s32.totalorder %s15, 0
    %p50 = por %p48, %p49
    %p51 = scmp.ne.s32.totalorder %s37, %s38
    %p52 = scmp.eq.s32.totalorder %s16, 1
    %p53 = por %p51, %p52
    %p55 = scmp.ne.s32.totalorder %s38, %s54
    %p56 = scmp.eq.s32.totalorder %s16, 0
    %p57 = por %p55, %p56
    %s58 = ssub.s32 %s17, %s29
    %s59 = ssub.s32 %s18, %s25
    %s60 = sor.u32 %s58, %s59
    %p61 = scmp.eq.s32.totalorder %s60, 0
    %s63 = sadd.s32 %s62, 1
    %s64 = scalar_select %p61, %s62, %s63
    %p67 = pneg %p61
    %p68 = scmp.eq.s32.totalorder %s10, 1
    %p69 = por %p67, %p68
    %p70 = scmp.ne.s32.totalorder %s62, %s65
    %p71 = scmp.eq.s32.totalorder %s10, 0
    %p72 = por %p70, %p71
    %p73 = scmp.ne.s32.totalorder %s62, %s65
    %p74 = scmp.eq.s32.totalorder %s15, 1
    %p75 = por %p73, %p74
    %p76 = scmp.ne.s32.totalorder %s65, %s66
    %p77 = scmp.eq.s32.totalorder %s15, 0
    %p78 = por %p76, %p77
    %p79 = scmp.ne.s32.totalorder %s65, %s66
    %p80 = scmp.eq.s32.totalorder %s16, 1
    %p81 = por %p79, %p80
    %p83 = scmp.ne.s32.totalorder %s66, %s82
    %p84 = scmp.eq.s32.totalorder %s16, 0
    %p85 = por %p83, %p84
    %s86 = sadd.s32 %s17, %s18
    %s87 = sadd.s32 %s29, %s25
    %s88 = ssub.s32 %s86, %s87
    %p89 = scmp.eq.s32.totalorder %s88, 0
    %s91 = sadd.s32 %s90, 1
    %s92 = scalar_select %p89, %s90, %s91
    %p95 = pneg %p89
    %p96 = scmp.eq.s32.totalorder %s10, 1
    %p97 = por %p95, %p96
    %p98 = scmp.ne.s32.totalorder %s90, %s93
    %p99 = scmp.eq.s32.totalorder %s10, 0
    %p100 = por %p98, %p99
    %p101 = scmp.ne.s32.totalorder %s90, %s93
    %p102 = scmp.eq.s32.totalorder %s15, 1
    %p103 = por %p101, %p102
    %p104 = scmp.ne.s32.totalorder %s93, %s94
    %p105 = scmp.eq.s32.totalorder %s15, 0
    %p106 = por %p104, %p105
    %p107 = scmp.ne.s32.totalorder %s93, %s94
    %p108 = scmp.eq.s32.totalorder %s16, 1
    %p109 = por %p107, %p108
    %p111 = scmp.ne.s32.totalorder %s94, %s110
    %p112 = scmp.eq.s32.totalorder %s16, 0
    %p113 = por %p111, %p112
    %p114 = scmp.le.s32.totalorder 1, %s10
    %p115 = scmp.lt.s32.totalorder %s10, 3
    %p116 = pnand %p114, %p115
    %p117 = pneg %p116
    // Predicated region
    $region9: #{_dml_partials.1} parent=5 // pred_check
      _
    $region10: #{_dml_partials.1} parent=5 // pred_check_branch
      %119 = sbr.rel (%p116) target = $region12
    $region11: #{_dml_partials.1} parent=5 // pred_region
      %s120 = ssub.s32 %s10, 1
    $region12: #{_dml_partials.1} parent=5 // pred_fallthru
      _
    %p121 = scmp.lt.s32.totalorder %s10, 2
    // Predicated region
    $region13: #{_dml_partials.1} parent=5 // pred_check
      %p122 = pneg %p121
    $region14: #{_dml_partials.1} parent=5 // pred_check_branch
      %124 = sbr.rel (%p122) target = $region16
    $region15: #{_dml_partials.1} parent=5 // pred_region
      // Predicated region
      $region17: #{_dml_partials.1} parent=15 // pred_check
        %p125 = pneg %p44
      $region18: #{_dml_partials.1} parent=15 // pred_check_branch
        %127 = sbr.rel (%p125) target = $region20
      $region19: #{_dml_partials.1} parent=15 // pred_region
        %s128 = smul.u32 2, %s18
        %p129 = scmp.lt.s32.totalorder %s17, 1
        %s130 = scalar_select %p129, %s17, 1
        %p131 = scmp.lt.s32.totalorder %s128, 1
        %s132 = scalar_select %p131, %s128, 1
        %s133 = smul.addr %s130, 2
        %s134 = sadd.s32 %s132, %s133
        %s135 = smul.addr %s134, 4
        %s136 = scalar_lea.vmem %s1, %s135
        %s137 = smul.u32 2, %s18
      $region20: #{_dml_partials.1} parent=15 // pred_fallthru
        _
      // Predicated region
      $region21: #{_dml_partials.1} parent=15 // pred_check
        %p138 = pneg %p72
      $region22: #{_dml_partials.1} parent=15 // pred_check_branch
        %140 = sbr.rel (%p138) target = $region24
      $region23: #{_dml_partials.1} parent=15 // pred_region
        %s141 = smul.u32 2, %s18
        %p142 = scmp.lt.s32.totalorder %s17, 1
        %s143 = scalar_select %p142, %s17, 1
        %p144 = scmp.lt.s32.totalorder %s141, 1
        %s145 = scalar_select %p144, %s141, 1
        %s146 = smul.addr %s143, 2
        %s147 = sadd.s32 %s145, %s146
        %s148 = smul.addr %s147, 2
        %s149 = scalar_lea.vmem %s2, %s148
        %s150 = smul.u32 2, %s18
      $region24: #{_dml_partials.1} parent=15 // pred_fallthru
        _
    $region16: #{_dml_partials.1} parent=5 // pred_fallthru
      _
    %p151 = scmp.le.s32.totalorder 1, %s10
    %p152 = scmp.lt.s32.totalorder %s10, 3
    %p153 = pnand %p151, %p152
    %p154 = pneg %p153
    // Predicated region
    $region25: #{_dml_partials.1} parent=5 // pred_check
      _
    $region26: #{_dml_partials.1} parent=5 // pred_check_branch
      %156 = sbr.rel (%p153) target = $region28
    $region27: #{_dml_partials.1} parent=5 // pred_region
      %s157 = ssub.s32 %s10, 1
      %s158 = smul.u32 2, %s20
      %p159 = scmp.lt.s32.totalorder %s19, 1
      %s160 = scalar_select %p159, %s19, 1
      %p161 = scmp.lt.s32.totalorder %s158, 1
      %s162 = scalar_select %p161, %s158, 1
      %s163 = smul.addr %s160, 2
      %s164 = sadd.s32 %s162, %s163
      %s165 = smul.addr %s164, 4
      %s166 = scalar_lea.vmem %s1, %s165
      %p167 = pneg %p50
      %p168 = pneg %p47
      %s169 = smul.u32 2, %s20
      %p170 = scmp.lt.s32.totalorder %s19, 1
      %s171 = scalar_select %p170, %s19, 1
      %p172 = scmp.lt.s32.totalorder %s169, 1
      %s173 = scalar_select %p172, %s169, 1
      %s174 = smul.addr %s171, 2
      %s175 = sadd.s32 %s173, %s174
      %s176 = smul.addr %s175, 2
      %s177 = scalar_lea.vmem %s2, %s176
      %p178 = pneg %p78
      %p179 = pneg %p75
      %p180 = pneg %p106
      %p181 = pneg %p103
      %s182 = sadd.s32 %s19, %s20
      %p183 = scmp.lt.s32.totalorder %s182, 1
      %s184 = scalar_select %p183, %s182, 1
      %s185 = smul.addr %s184, 8
      %s186 = scalar_lea.vmem %s3, %s185
      %s187 = smul.u32 2, %s20
      %p188 = scmp.lt.s32.totalorder %s19, 1
      %s189 = scalar_select %p188, %s19, 1
      %p190 = scmp.lt.s32.totalorder %s187, 1
      %s191 = scalar_select %p190, %s187, 1
      %s192 = smul.addr %s189, 2
      %s193 = sadd.s32 %s191, %s192
      %s194 = smul.addr %s193, 4
      %s195 = scalar_lea.vmem %s1, %s194
      %s196 = smul.u32 2, %s20
      %s197 = smul.u32 2, %s20
      %p198 = scmp.lt.s32.totalorder %s19, 1
      %s199 = scalar_select %p198, %s19, 1
      %p200 = scmp.lt.s32.totalorder %s197, 1
      %s201 = scalar_select %p200, %s197, 1
      %s202 = smul.addr %s199, 2
      %s203 = sadd.s32 %s201, %s202
      %s204 = smul.addr %s203, 2
      %s205 = scalar_lea.vmem %s2, %s204
      %s206 = smul.u32 2, %s20
      %s207 = sadd.s32 %s19, %s20
      %p208 = scmp.lt.s32.totalorder %s207, 1
      %s209 = scalar_select %p208, %s207, 1
      %s210 = smul.addr %s209, 8
      %s211 = scalar_lea.vmem %s3, %s210
      %s212 = sadd.s32 %s19, %s20
      %v213 = vld [vmem:[%s195] sm:$0xff]
      %v214 = vld [vmem:[%s205] sm:$0xf]
      %v215 = vcvt.f32.s32.to.zero.pseudo %v214
      %vm216 = vcmp.ne.s32.totalorder %v215, 4294967196
      %v217 = vsel %vm216, %v215, 0
      %219 = vst [vmem:[#allocation1] ss:$2 sm:$0xff] %v213
      %v220 = vld.sshfl [vmem:[#allocation1] sm:$0xff pattern:$0x75316420]
      %v221 = vld.sshfl [vmem:[#allocation1 + $0x8] sm:$0xff pattern:$0x75316420]
      %vm224 = vcmask 1043456
      %v225 = vsel %vm224, %v220, -inf
      %v226 = vrot.slane %v225, 4
      %v227 = vmax.f32 %v225, %v226
      %v228 = vrot.slane %v227, 2
      %v229 = vmax.f32 %v227, %v228
      %v230 = vrot.slane %v229, 1
      %v231 = vmax.f32 %v229, %v230
      %v232 = vsel %vm224, %v221, -inf
      %v233 = vrot.slane %v232, 4
      %v234 = vmax.f32 %v232, %v233
      %v235 = vrot.slane %v234, 2
      %v236 = vmax.f32 %v234, %v235
      %v237 = vrot.slane %v236, 1
      %v238 = vmax.f32 %v236, %v237
      %v241 = vrot.slane %v238, 4
      %v242 = vsel %vm224, %v231, %v241
      %v244 = vsub.f32 %v213, %v242
      %v245 = vmul.f32 %v244, 1.442695
      %v246 = vpow.pop %v245
      %248 = vst [vmem:[#allocation1] ss:$2 sm:$0xff] %v246
      %v249 = vld.sshfl [vmem:[#allocation1] sm:$0xff pattern:$0x75316420]
      %v250 = vld.sshfl [vmem:[#allocation1 + $0x8] sm:$0xff pattern:$0x75316420]
      %v253 = vsel %vm224, %v249, 0.0
      %v254 = vrot.slane %v253, 4
      %v255 = vadd.f32 %v253, %v254
      %v256 = vrot.slane %v255, 2
      %v257 = vadd.f32 %v255, %v256
      %v258 = vrot.slane %v257, 1
      %v259 = vadd.f32 %v257, %v258
      %v260 = vsel %vm224, %v250, 0.0
      %v261 = vrot.slane %v260, 4
      %v262 = vadd.f32 %v260, %v261
      %v263 = vrot.slane %v262, 2
      %v264 = vadd.f32 %v262, %v263
      %v265 = vrot.slane %v264, 1
      %v266 = vadd.f32 %v264, %v265
      %v267 = vlog2.pop %v259
      %v268 = vmul.f32 %v267, 0.6931472
      %v269 = vlog2.pop %v266
      %v270 = vmul.f32 %v269, 0.6931472
      %v271 = vadd.f32 %v231, %v268
      %v272 = vadd.f32 %v238, %v270
      %v273 = vlaneseq
      %v274 = vshrl.u32 %v273, 7
      %v275 = vperm.slane %v217, 0
      %v276 = vperm.slane %v217, 2
      %v277 = vperm.slane %v275, 0
      %v278 = vperm.slane %v276, 0
      %vm279 = vcmp.eq.s32.totalorder %v274, %v277
      %vm280 = vcmp.eq.s32.totalorder %v274, %v278
      %v281 = vsel %vm279, 1, 0
      %v282 = vsel %vm280, 1, 0
      %v283 = vcvt.s32.f32 %v281
      %v284 = vcvt.s32.f32 %v282
      %285 = vst [vmem:[#allocation1] ss:$2 sm:$0xff] %v213
      %v286 = vld.sshfl [vmem:[#allocation1] sm:$0xff pattern:$0x75316420]
      %v287 = vld.sshfl [vmem:[#allocation1 + $0x8] sm:$0xff pattern:$0x75316420]
      %v290 = vmul.f32 %v283, %v286
      %v291 = vmul.f32 %v284, %v287
      %v292 = vsel %vm224, %v290, 0.0
      %v293 = vrot.slane %v292, 4
      %v294 = vadd.f32 %v292, %v293
      %v295 = vrot.slane %v294, 2
      %v296 = vadd.f32 %v294, %v295
      %v297 = vrot.slane %v296, 1
      %v298 = vadd.f32 %v296, %v297
      %v299 = vsel %vm224, %v291, 0.0
      %v300 = vrot.slane %v299, 4
      %v301 = vadd.f32 %v299, %v300
      %v302 = vrot.slane %v301, 2
      %v303 = vadd.f32 %v301, %v302
      %v304 = vrot.slane %v303, 1
      %v305 = vadd.f32 %v303, %v304
      %v306 = vsub.f32 %v271, %v298
      %v307 = vsub.f32 %v272, %v305
      %v310 = vrot.slane %v307, 6
      %vm311 = vcmask 1041408
      %v312 = vsel %vm311, %v306, %v310
      %v314 = vsel %vm216, %v312, 0.0
      %v315 = vsel %vm216, 1, 0
      %v316 = vcvt.s32.f32 %v315
      %v318 = vperm.slane %v314, 0
      %v319 = vperm.slane %v314, 2
      %vm322 = vcmask 1040384
      %v323 = vsel %vm322, %v318, 0.0
      %v324 = vsel %vm322, %v319, 0.0
      %v325 = vadd.f32 %v323, %v324
      %326 = vadd.xlane.f32.xlu0 %v325
      %v327 = vpop.xlane.xlu0 %326
      %v329 = vperm.slane %v316, 0
      %v330 = vperm.slane %v316, 2
      %v333 = vsel %vm322, %v329, 0.0
      %v334 = vsel %vm322, %v330, 0.0
      %v335 = vadd.f32 %v333, %v334
      %336 = vadd.xlane.f32.xlu0 %v335
      %v337 = vpop.xlane.xlu0 %336
      %vm338 = vcmp.eq.f32.partialorder %v213, %v242
      %v340 = vunpack.c.l.s4 839922192
      %v341 = vunpack.c.0.s8 %v340
      %v342 = vperm.slane %v274, %v341
      %v343 = vsel %vm338, %v342, 4
      %344 = vst [vmem:[#allocation1] ss:$2 sm:$0xff] %v343
      %v345 = vld.sshfl [vmem:[#allocation1] sm:$0xff pattern:$0x75316420]
      %v346 = vld.sshfl [vmem:[#allocation1 + $0x8] sm:$0xff pattern:$0x75316420]
      %v347 = vsel %vm224, %v345, 2147483647
      %v348 = vrot.slane %v347, 4
      %vm349 = vcmp.lt.s32.totalorder %v347, %v348
      %v350 = vsel %vm349, %v347, %v348
      %v351 = vrot.slane %v350, 2
      %vm352 = vcmp.lt.s32.totalorder %v350, %v351
      %v353 = vsel %vm352, %v350, %v351
      %v354 = vrot.slane %v353, 1
      %vm355 = vcmp.lt.s32.totalorder %v353, %v354
      %v356 = vsel %vm355, %v353, %v354
      %v357 = vsel %vm224, %v346, 2147483647
      %v358 = vrot.slane %v357, 4
      %vm359 = vcmp.lt.s32.totalorder %v357, %v358
      %v360 = vsel %vm359, %v357, %v358
      %v361 = vrot.slane %v360, 2
      %vm362 = vcmp.lt.s32.totalorder %v360, %v361
      %v363 = vsel %vm362, %v360, %v361
      %v364 = vrot.slane %v363, 1
      %vm365 = vcmp.lt.s32.totalorder %v363, %v364
      %v366 = vsel %vm365, %v363, %v364
      %v367 = vsub.f32 %v231, %v271
      %v368 = vsub.f32 %v238, %v272
      %v369 = vmul.f32 %v367, 1.442695
      %v370 = vpow.pop %v369
      %v371 = vmul.f32 %v368, 1.442695
      %v372 = vpow.pop %v371
      %v373 = vsub.f32 %v298, %v271
      %v374 = vsub.f32 %v305, %v272
      %v375 = vperm.slane %v215, 0
      %v376 = vperm.slane %v215, 2
      %vm377 = vcmp.ne.s32.totalorder %v356, %v375
      %vm378 = vcmp.ne.s32.totalorder %v366, %v376
      %v380 = vperm.slane %v214, 1
      %v381 = vperm.slane %v214, 3
      %vm384 = vcmp.gt.f32.partialorder %v370, %v380
      %vm385 = vcmp.gt.f32.partialorder %v372, %v381
      %v386 = vsel %vm377, 4.0, 2.0
      %v387 = vsel %vm378, 4.0, 2.0
      %vm388 = vmand %vm377, %vm384
      %vm389 = vmand %vm378, %vm385
      %v390 = vmul.f32 %v386, %v373
      %v391 = vmul.f32 %v387, %v374
      %v392 = vmul.f32 %v390, 1.442695
      %v393 = vpow.pop %v392
      %v394 = vmul.f32 %v391, 1.442695
      %v395 = vpow.pop %v394
      %v396 = vsel %vm388, 0.0, %v393
      %v397 = vsel %vm389, 0.0, %v395
      %s398 = sld [smem:[#allocation3]]
      %p399 = scmp.lt.s32.totalorder %s19, %s398
      %s400 = scalar_select %p399, 1, 0
      %s401 = scvt.s32.f32 %s400
      %v402 = vstv %s401
      %v403 = vmul.f32 %v396, %v402
      %v404 = vmul.f32 %v397, %v402
      %s405 = ssub.f32 1.0, %s401
      %v406 = vstv %s405
      %v407 = vadd.f32 %v403, %v406
      %v408 = vadd.f32 %v404, %v406
      %v411 = vrot.slane %v408, 6
      %v412 = vsel %vm311, %v407, %v411
      %v414 = vsel %vm216, %v412, 0.0
      %v415 = vperm.slane %v315, 0
      %v416 = vperm.slane %v315, 2
      %vm417 = vcmp.ne.s32.totalorder %v415, 0
      %vm418 = vcmp.ne.s32.totalorder %v416, 0
      %vm419 = vmand %vm377, %vm417
      %vm420 = vmand %vm378, %vm418
      %v421 = vsel %vm419, 1, 0
      %v422 = vsel %vm420, 1, 0
      %v423 = vcvt.s32.f32 %v421
      %v424 = vcvt.s32.f32 %v422
      %v425 = vmul.f32 %v423, %v402
      %v426 = vmul.f32 %v424, %v402
      %vm427 = vmand %vm388, %vm417
      %vm428 = vmand %vm389, %vm418
      %v429 = vsel %vm427, 1, 0
      %v430 = vsel %vm428, 1, 0
      %v431 = vcvt.s32.f32 %v429
      %v432 = vcvt.s32.f32 %v430
      %v433 = vmul.f32 %v431, %v402
      %v434 = vmul.f32 %v432, %v402
      %v435 = vmul.f32 %v314, %v414
      %v437 = vperm.slane %v435, 0
      %v438 = vperm.slane %v435, 2
      %v441 = vsel %vm322, %v437, 0.0
      %v442 = vsel %vm322, %v438, 0.0
      %v443 = vadd.f32 %v441, %v442
      %444 = vadd.xlane.f32.xlu0 %v443
      %v445 = vpop.xlane.xlu0 %444
      %v446 = vsel %vm322, %v425, 0.0
      %v447 = vsel %vm322, %v426, 0.0
      %v448 = vadd.f32 %v446, %v447
      %449 = vadd.xlane.f32.xlu0 %v448
      %v450 = vpop.xlane.xlu0 %449
      %v451 = vsel %vm322, %v433, 0.0
      %v452 = vsel %vm322, %v434, 0.0
      %v453 = vadd.f32 %v451, %v452
      %454 = vadd.xlane.f32.xlu0 %v453
      %v455 = vpop.xlane.xlu0 %454
      %v457 = vperm.slane %v414, 0
      %v458 = vperm.slane %v414, 2
      %v461 = vsel %vm322, %v457, 0.0
      %v462 = vsel %vm322, %v458, 0.0
      %v463 = vadd.f32 %v461, %v462
      %464 = vadd.xlane.f32.xlu0 %v463
      %v465 = vpop.xlane.xlu0 %464
      %vm466 = vcmp.eq.s32.totalorder %v274, 0
      %v467 = vperm.slane %v327, 0
      %v468 = vsel %vm466, %v467, 0.0
      %vm469 = vcmp.eq.s32.totalorder %v274, 2
      %v470 = vperm.slane %v337, 0
      %v471 = vsel %vm469, %v470, %v468
      %vm472 = vcmp.eq.s32.totalorder %v274, 1
      %v473 = vperm.slane %v445, 0
      %v474 = vsel %vm472, %v473, %v471
      %vm475 = vcmp.eq.s32.totalorder %v274, 3
      %v476 = vperm.slane %v450, 0
      %v477 = vsel %vm475, %v476, %v474
      %vm478 = vcmp.eq.s32.totalorder %v274, 4
      %v479 = vperm.slane %v455, 0
      %v480 = vsel %vm478, %v479, %v477
      %vm481 = vcmp.eq.s32.totalorder %v274, 5
      %v482 = vperm.slane %v465, 0
      %v483 = vsel %vm481, %v482, %v480
      %484 = vst [vmem:[%s211] sm:$0xff] %v483
      %s485 = sadd.s32 %s19, %s20
      %p486 = scmp.lt.s32.totalorder %s485, 1
      %s487 = scalar_select %p486, %s485, 1
      %s488 = smul.addr %s487, 8
      %s489 = scalar_lea.vmem %s3, %s488
      // Predicated region
      $region29: #{_dml_partials.1} parent=27 // pred_check
        %p490 = pneg %p103
      $region30: #{_dml_partials.1} parent=27 // pred_check_branch
        %492 = sbr.rel (%p490) target = $region32
      $region31: #{_dml_partials.1} parent=27 // pred_region
        %s493 = sadd.s32 %s19, %s20
      $region32: #{_dml_partials.1} parent=27 // pred_fallthru
        _
    $region28: #{_dml_partials.1} parent=5 // pred_fallthru
      _
    %p494 = scmp.le.s32.totalorder 2, %s10
    // Predicated region
    $region33: #{_dml_partials.1} parent=5 // pred_check
      %p495 = pneg %p494
    $region34: #{_dml_partials.1} parent=5 // pred_check_branch
      %497 = sbr.rel (%p495) target = $region36
    $region35: #{_dml_partials.1} parent=5 // pred_region
      %s498 = ssub.s32 %s10, 2
      // Predicated region
      $region37: #{_dml_partials.1} parent=35 // pred_check
        %p499 = pneg %p109
      $region38: #{_dml_partials.1} parent=35 // pred_check_branch
        %501 = sbr.rel (%p499) target = $region40
      $region39: #{_dml_partials.1} parent=35 // pred_region
        %s502 = sadd.s32 %s21, %s22
        %p503 = scmp.lt.s32.totalorder %s502, 1
        %s504 = scalar_select %p503, %s502, 1
        %s505 = smul.addr %s504, 8
        %s506 = scalar_lea.vmem %s3, %s505
      $region40: #{_dml_partials.1} parent=35 // pred_fallthru
        _
    $region36: #{_dml_partials.1} parent=5 // pred_fallthru
      _
  $region6: #{_dml_partials.1} parent=0 // loop_footer
    %s14 = sadd.s32 1, %s10
  $region7: #{_dml_partials.1} parent=0 // loop_footer_branch
    %9 = sbr.rel target = $region3
  $region8: #{_dml_partials.1} parent=0 // loop_exit
    _

</llo_original>
